<compile_context>
chip_gen: v7x
topology: tpu7x:2x2x1
jax: 0.10.0
libtpu: 0.0.40
codegen_flags: <defaults>
</compile_context>

<pallas_src>
import jax
import jax.numpy as jnp
from jax.experimental import pallas as pl
from jax.experimental.pallas import tpu as pltpu

LOG_STD_MIN = -20.0
LOG_STD_MAX = 2.0

_LANE = 128
_SUBLANE = 8


def _round_up(x, m):
    return ((x + m - 1) // m) * m


# --------------------------------------------------------------------------
# Kernel
# --------------------------------------------------------------------------
def _make_policy_kernel(in_p, h_p, a_p, a2_p):
    """Builds the fused MLP kernel for statically padded dims."""
    r_w1 = 0
    r_w2 = in_p
    r_wh = in_p + h_p

    def kernel(x_ref, wp_ref, bp_ref, out_ref):
        x = x_ref[...]                                      # (TB, in_p) f32

        # Static, tile-aligned slices of the packed parameter buffers.
        w1 = wp_ref[r_w1:r_w1 + in_p, 0:h_p]                # bf16 (in_p, h_p)
        w2 = wp_ref[r_w2:r_w2 + h_p, 0:h_p]                 # bf16 (h_p, h_p)
        wh = wp_ref[r_wh:r_wh + h_p, 0:a2_p]                # bf16 (h_p, 2*a_p)
        b1 = bp_ref[0:1, 0:h_p]                             # f32 (1, h_p)
        b2 = bp_ref[1:2, 0:h_p]                             # f32 (1, h_p)
        bh = bp_ref[2:3, 0:a2_p]                            # f32 (1, 2*a_p)

        # linear1 + relu  (bf16 operands, f32 accumulation)
        h1 = jnp.dot(x.astype(jnp.bfloat16), w1,
                     preferred_element_type=jnp.float32) + b1
        h1 = jnp.maximum(h1, 0.0)

        # linear2 + relu
        h2 = jnp.dot(h1.astype(jnp.bfloat16), w2,
                     preferred_element_type=jnp.float32) + b2
        h2 = jnp.maximum(h2, 0.0)

        # fused mean | log_std head: one matmul, one lane-dense store.
        head = jnp.dot(h2.astype(jnp.bfloat16), wh,
                       preferred_element_type=jnp.float32) + bh

        # columns [0, a_p)      -> mean (unclamped)
        # columns [a_p, 2*a_p)  -> log_std (clamped)
        col = jax.lax.broadcasted_iota(jnp.int32, head.shape, 1)
        clamped = jnp.clip(head, LOG_STD_MIN, LOG_STD_MAX)
        out_ref[...] = jnp.where(col >= a_p, clamped, head).astype(out_ref.dtype)

    return kernel


# --------------------------------------------------------------------------
# Offline parameter packing
# --------------------------------------------------------------------------
def pack_params(params, num_inputs, num_actions, hidden_size):
    """Packs the 8 PyTorch-style parameter arrays into:
         wp: bf16 (in_p + 2*h_p, COL)  -- W1 | W2 | [Wm ; Ws] row-stacked
         bp: f32  (8, COL)             -- rows 0/1/2 = b1 / b2 / [bm ; bs]
       Everything zero-padded to 128-lane slabs."""
    in_p = _round_up(num_inputs, _LANE)
    h_p = _round_up(hidden_size, _LANE)
    a_p = _round_up(num_actions, _LANE)
    a2_p = 2 * a_p
    col = max(h_p, a2_p)

    bf = lambda a: a.astype(jnp.bfloat16)

    wp = jnp.zeros((in_p + 2 * h_p, col), jnp.bfloat16)
    wp = wp.at[0:num_inputs, 0:hidden_size].set(bf(params["w1"]))
    wp = wp.at[in_p:in_p + hidden_size, 0:hidden_size].set(bf(params["w2"]))
    wp = wp.at[in_p + h_p:in_p + h_p + hidden_size,
               0:num_actions].set(bf(params["wm"]))
    wp = wp.at[in_p + h_p:in_p + h_p + hidden_size,
               a_p:a_p + num_actions].set(bf(params["ws"]))

    bp = jnp.zeros((_SUBLANE, col), jnp.float32)
    bp = bp.at[0, 0:hidden_size].set(params["b1"])
    bp = bp.at[1, 0:hidden_size].set(params["b2"])
    bp = bp.at[2, 0:num_actions].set(params["bm"])
    bp = bp.at[2, a_p:a_p + num_actions].set(params["bs"])

    return {
        "wp": wp,
        "bp": bp,
        "dims": dict(num_inputs=num_inputs, num_actions=num_actions,
                     hidden_size=hidden_size, in_p=in_p, h_p=h_p,
                     a_p=a_p, a2_p=a2_p, col=col),
    }


# --------------------------------------------------------------------------
# Wrapper
# --------------------------------------------------------------------------
def policy_forward(state, packed, *, batch_tile=512):
    """Runs PolicyNetwork.forward as a single Pallas TPU kernel.

    state:  (B, num_inputs) float32
    packed: output of pack_params(...)
    returns (mean, log_std), each (B, num_actions) float32
    """
    dims = packed["dims"]
    in_p, h_p = dims["in_p"], dims["h_p"]
    a_p, a2_p = dims["a_p"], dims["a2_p"]
    num_inputs, num_actions = dims["num_inputs"], dims["num_actions"]
    wp, bp = packed["wp"], packed["bp"]

    b = state.shape[0]
    assert state.shape[1] == num_inputs

    b8 = _round_up(max(b, _SUBLANE), _SUBLANE)
    tb = min(batch_tile, b8)
    b_pad = _round_up(b8, tb)
    grid = (b_pad // tb,)

    # zero-pad batch to the tile size and features to the 128-lane slab
    x = jnp.pad(state.astype(jnp.float32),
                ((0, b_pad - b), (0, in_p - num_inputs)))

    kernel = _make_policy_kernel(in_p, h_p, a_p, a2_p)

    flops = 2 * b_pad * (in_p * h_p + h_p * h_p + h_p * a2_p)
    bytes_accessed = (x.size * 4 + wp.size * 2 + bp.size * 4
                      + b_pad * a2_p * 4)

    out = pl.pallas_call(
        kernel,
        out_shape=jax.ShapeDtypeStruct((b_pad, a2_p), jnp.float32),
        grid=grid,
        in_specs=[
            pl.BlockSpec((tb, in_p), lambda i: (i, 0)),      # state: batch-tiled
            pl.BlockSpec(wp.shape, lambda i: (0, 0)),        # weights: resident
            pl.BlockSpec(bp.shape, lambda i: (0, 0)),        # biases: resident
        ],
        out_specs=pl.BlockSpec((tb, a2_p), lambda i: (i, 0)),
        compiler_params=pltpu.CompilerParams(
            dimension_semantics=("parallel",)),
        cost_estimate=pl.CostEstimate(
            flops=flops, transcendentals=0, bytes_accessed=bytes_accessed),
    )(x, wp, bp)

    mean = out[:b, :num_actions]
    log_std = out[:b, a_p:a_p + num_actions]
    return mean, log_std


# --------------------------------------------------------------------------
# Init (matches PyTorch PolicyNetwork init semantics)
# --------------------------------------------------------------------------
def init_params(key, num_inputs, num_actions, hidden_size, init_w=0.003):
    """linear1/linear2: default nn.Linear init U(-1/sqrt(fan_in), 1/sqrt(fan_in));
       mean/log_std heads: U(-init_w, init_w). Weights stored as (in, out)."""
    ks = jax.random.split(key, 8)
    u = lambda k, shape, bound: jax.random.uniform(
        k, shape, jnp.float32, minval=-bound, maxval=bound)
    b1_bound = 1.0 / float(jnp.sqrt(jnp.float32(num_inputs)))
    b2_bound = 1.0 / float(jnp.sqrt(jnp.float32(hidden_size)))
    return {
        "w1": u(ks[0], (num_inputs, hidden_size), b1_bound),
        "b1": u(ks[1], (hidden_size,), b1_bound),
        "w2": u(ks[2], (hidden_size, hidden_size), b2_bound),
        "b2": u(ks[3], (hidden_size,), b2_bound),
        "wm": u(ks[4], (hidden_size, num_actions), init_w),
        "bm": u(ks[5], (num_actions,), init_w),
        "ws": u(ks[6], (hidden_size, num_actions), init_w),
        "bs": u(ks[7], (num_actions,), init_w),
    }


# Plain-JAX reference using the same bf16-operand / f32-accumulate math.
def _reference_forward(state, p):
    bf = lambda a: a.astype(jnp.bfloat16)
    h1 = jnp.maximum(jnp.dot(bf(state), bf(p["w1"]),
                             preferred_element_type=jnp.float32) + p["b1"], 0.0)
    h2 = jnp.maximum(jnp.dot(bf(h1), bf(p["w2"]),
                             preferred_element_type=jnp.float32) + p["b2"], 0.0)
    mean = jnp.dot(bf(h2), bf(p["wm"]),
                   preferred_element_type=jnp.float32) + p["bm"]
    log_std = jnp.dot(bf(h2), bf(p["ws"]),
                      preferred_element_type=jnp.float32) + p["bs"]
    log_std = jnp.clip(log_std, LOG_STD_MIN, LOG_STD_MAX)
    return mean, log_std


if __name__ == "__main__":
    key = jax.random.PRNGKey(0)
    k_state, k_params = jax.random.split(key)

    batch = 8
    num_inputs = 16
    num_actions = 4
    hidden_size = 32

    state = jax.random.normal(k_state, (batch, num_inputs), jnp.float32)
    params = init_params(k_params, num_inputs, num_actions, hidden_size)
    packed = pack_params(params, num_inputs, num_actions, hidden_size)

    mean, log_std = policy_forward(state, packed)
    jax.block_until_ready((mean, log_std))

    mean_ref, log_std_ref = _reference_forward(state, params)
    assert mean.shape == (batch, num_actions)
    assert log_std.shape == (batch, num_actions)
    assert jnp.allclose(mean, mean_ref, atol=1e-3, rtol=1e-3), "mean mismatch"
    assert jnp.allclose(log_std, log_std_ref, atol=1e-3, rtol=1e-3), "log_std mismatch"

    print("KERNEL_OK")
</pallas_src>

<mosaic_0001>
module attributes {stable_mosaic.version = 11 : i64} {
  func.func @kernel(%arg0: i32, %arg1: memref<8x128xf32, #tpu.memory_space<vmem>>, %arg2: memref<384x256xbf16, #tpu.memory_space<vmem>>, %arg3: memref<8x256xf32, #tpu.memory_space<vmem>>, %arg4: memref<8x256xf32, #tpu.memory_space<vmem>>) attributes {dimension_semantics = [#tpu.dimension_semantics<parallel>], iteration_bounds = array<i64: 1>, scalar_prefetch = 0 : i64, scratch_operands = 0 : i64, tpu.core_type = #tpu.core_type<tc>, window_params = [{transform_indices = @transform_0, window_bounds = array<i64: 8, 128>}, {pipeline_mode = #tpu.pipeline_mode<synchronous>, transform_indices = @transform_1, window_bounds = array<i64: 384, 256>}, {pipeline_mode = #tpu.pipeline_mode<synchronous>, transform_indices = @transform_2, window_bounds = array<i64: 8, 256>}, {transform_indices = @transform_3, window_bounds = array<i64: 8, 256>}]} {
    %c0 = arith.constant 0 : index
    %c0_0 = arith.constant 0 : index
    %0 = vector.load %arg1[%c0, %c0_0] : memref<8x128xf32, #tpu.memory_space<vmem>>, vector<8x128xf32>
    %c0_1 = arith.constant 0 : index
    %c0_2 = arith.constant 0 : index
    %1 = vector.load %arg2[%c0_1, %c0_2] : memref<384x256xbf16, #tpu.memory_space<vmem>>, vector<128x128xbf16>
    %c128 = arith.constant 128 : index
    %c0_3 = arith.constant 0 : index
    %2 = vector.load %arg2[%c128, %c0_3] : memref<384x256xbf16, #tpu.memory_space<vmem>>, vector<128x128xbf16>
    %c256 = arith.constant 256 : index
    %c0_4 = arith.constant 0 : index
    %3 = vector.load %arg2[%c256, %c0_4] : memref<384x256xbf16, #tpu.memory_space<vmem>>, vector<128x256xbf16>
    %c0_5 = arith.constant 0 : index
    %c0_6 = arith.constant 0 : index
    %4 = vector.load %arg3[%c0_5, %c0_6] : memref<8x256xf32, #tpu.memory_space<vmem>>, vector<1x128xf32>
    %c1 = arith.constant 1 : index
    %c0_7 = arith.constant 0 : index
    %5 = vector.load %arg3[%c1, %c0_7] : memref<8x256xf32, #tpu.memory_space<vmem>>, vector<1x128xf32>
    %c2 = arith.constant 2 : index
    %c0_8 = arith.constant 0 : index
    %6 = vector.load %arg3[%c2, %c0_8] : memref<8x256xf32, #tpu.memory_space<vmem>>, vector<1x256xf32>
    %7 = arith.truncf %0 : vector<8x128xf32> to vector<8x128xbf16>
    %cst = arith.constant dense<0.000000e+00> : vector<8x128xf32>
    %8 = tpu.matmul %7, %1, %cst {dimension_numbers = #tpu.dot_dimension_numbers<[1], [0], [0], [1], [0, 0, 1, 1], [], []>} : vector<8x128xbf16>, vector<128x128xbf16>, vector<8x128xf32> -> vector<8x128xf32>
    %9 = vector.broadcast %4 : vector<1x128xf32> to vector<8x128xf32>
    %10 = arith.addf %8, %9 : vector<8x128xf32>
    %cst_9 = arith.constant 0.000000e+00 : f32
    %11 = vector.broadcast %cst_9 : f32 to vector<8x128xf32>
    %12 = arith.maximumf %10, %11 : vector<8x128xf32>
    %13 = arith.truncf %12 : vector<8x128xf32> to vector<8x128xbf16>
    %cst_10 = arith.constant dense<0.000000e+00> : vector<8x128xf32>
    %14 = tpu.matmul %13, %2, %cst_10 {dimension_numbers = #tpu.dot_dimension_numbers<[1], [0], [0], [1], [0, 0, 1, 1], [], []>} : vector<8x128xbf16>, vector<128x128xbf16>, vector<8x128xf32> -> vector<8x128xf32>
    %15 = vector.broadcast %5 : vector<1x128xf32> to vector<8x128xf32>
    %16 = arith.addf %14, %15 : vector<8x128xf32>
    %cst_11 = arith.constant 0.000000e+00 : f32
    %17 = vector.broadcast %cst_11 : f32 to vector<8x128xf32>
    %18 = arith.maximumf %16, %17 : vector<8x128xf32>
    %19 = arith.truncf %18 : vector<8x128xf32> to vector<8x128xbf16>
    %cst_12 = arith.constant dense<0.000000e+00> : vector<8x256xf32>
    %20 = tpu.matmul %19, %3, %cst_12 {dimension_numbers = #tpu.dot_dimension_numbers<[1], [0], [0], [1], [0, 0, 1, 1], [], []>} : vector<8x128xbf16>, vector<128x256xbf16>, vector<8x256xf32> -> vector<8x256xf32>
    %21 = vector.broadcast %6 : vector<1x256xf32> to vector<8x256xf32>
    %22 = arith.addf %20, %21 : vector<8x256xf32>
    %23 = tpu.iota {dimensions = array<i32: 1>} : vector<8x256xi32>
    %cst_13 = arith.constant -2.000000e+01 : f32
    %cst_14 = arith.constant 2.000000e+00 : f32
    %24 = vector.broadcast %cst_13 : f32 to vector<8x256xf32>
    %25 = arith.maximumf %24, %22 : vector<8x256xf32>
    %26 = vector.broadcast %cst_14 : f32 to vector<8x256xf32>
    %27 = arith.minimumf %26, %25 : vector<8x256xf32>
    %c128_i32 = arith.constant 128 : i32
    %28 = vector.broadcast %c128_i32 : i32 to vector<8x256xi32>
    %29 = arith.cmpi sge, %23, %28 : vector<8x256xi32>
    %30 = arith.select %29, %27, %22 : vector<8x256xi1>, vector<8x256xf32>
    %c0_15 = arith.constant 0 : index
    %c0_16 = arith.constant 0 : index
    %31 = vector.load %arg4[%c0_15, %c0_16] : memref<8x256xf32, #tpu.memory_space<vmem>>, vector<8x256xf32>
    tpu.vector_store %arg4[%c0_15, %c0_16], %30 {strides = array<i32>} : memref<8x256xf32, #tpu.memory_space<vmem>>, vector<8x256xf32>,
    return
  }
  func.func @transform_0(%arg0: i32) -> (i32, i32) {
    %c0_i32 = arith.constant 0 : i32
    %c0_i32_0 = arith.constant 0 : i32
    return %arg0, %c0_i32 : i32, i32
  }
  func.func @transform_1(%arg0: i32) -> (i32, i32) {
    %c0_i32 = arith.constant 0 : i32
    %c0_i32_0 = arith.constant 0 : i32
    %c0_i32_1 = arith.constant 0 : i32
    return %c0_i32, %c0_i32_0 : i32, i32
  }
  func.func @transform_2(%arg0: i32) -> (i32, i32) {
    %c0_i32 = arith.constant 0 : i32
    %c0_i32_0 = arith.constant 0 : i32
    %c0_i32_1 = arith.constant 0 : i32
    return %c0_i32, %c0_i32_0 : i32, i32
  }
  func.func @transform_3(%arg0: i32) -> (i32, i32) {
    %c0_i32 = arith.constant 0 : i32
    %c0_i32_0 = arith.constant 0 : i32
    return %arg0, %c0_i32 : i32, i32
  }
}

</mosaic_0001>

<llo_original>
// kernel: tpu_custom_call.1
$region0: #{tpu_custom_call.1}
  #allocation0 [shape = 'u32[]', space=smem, size = 0x4, offset = 0x4, fixed_abs, tag = 'smem constant byte address 0x4 - core index']
  #allocation1 [shape = 'u32[144,128]{1,0:T(1,128)}', space=vmem, size = 0x12000, scoped, tag = 'internal scratch']
  %s0 = inlined_call_operand.hbm [shape: f32[8,128], index: 0, kind: input, shape index: {}]
  %s1 = inlined_call_operand.hbm [shape: bf16[384,256], index: 1, kind: input, shape index: {}]
  %s2 = inlined_call_operand.hbm [shape: f32[8,256], index: 2, kind: input, shape index: {}]
  %s3 = inlined_call_operand.hbm [shape: f32[8,256], index: 3, kind: output, shape index: {}]
  %s4 = sld [smem:[#allocation0]]
  $region34: #{tpu_custom_call.1} parent=0
    _
  %s6 = ssub.s32 1, %s4
  %s7 = scalar_select 0, %s6, %s4
  $region1: #{tpu_custom_call.1} parent=0
    #allocation2 [shape = 'u8[4096]{0}', space=vmem, size = 0x1000, scoped, tag = 'input window, operand 0, single buffered']
    #allocation3 [shape = 's32[1]{0}', space=sflag, size = 0x4, scoped, tag = 'scoped memory for tpu_custom_call.1']
    #allocation4 [shape = 's32[1]{0}', space=sflag, size = 0x4, scoped, tag = 'scoped memory for tpu_custom_call.1']
    #allocation5 [shape = 'u8[196608]{0}', space=vmem, size = 0x30000, scoped, tag = 'input window, operand 1, single buffered']
    #allocation6 [shape = 's32[1]{0}', space=sflag, size = 0x4, scoped, tag = 'scoped memory for tpu_custom_call.1']
    #allocation7 [shape = 'u8[8192]{0}', space=vmem, size = 0x2000, scoped, tag = 'input window, operand 2, single buffered']
    #allocation8 [shape = 'u8[8192]{0}', space=vmem, size = 0x2000, scoped, tag = 'output window, operand 0, single buffered']
    %8 = vsyncpa [#allocation3], 0
    %9 = vsyncpa [#allocation6], 0
    %10 = vsyncpa [#allocation4], 0
    // Predicated region
    $region2: #{tpu_custom_call.1} parent=1 // pred_check
      _
    $region3: #{tpu_custom_call.1} parent=1 // pred_check_branch
      %12 = sbr.rel (0) target = $region5
    $region4: #{tpu_custom_call.1} parent=1 // pred_region
      %s14 = ssub.s32 128, 128
      %15 = vsyncadd [#allocation3], %s14
      %s17 = sshll.u32 [#allocation2], 4
      %s18 = int_to_ptr.vmem [resolvable:$true] %s17
      %20 = dma.hbm_to_vmem [thread:$0]  %s0, 128, %s18, [#allocation3]
    $region5: #{tpu_custom_call.1} parent=1 // pred_fallthru
      _
    // Predicated region
    $region6: #{tpu_custom_call.1} parent=1 // pred_check
      _
    $region7: #{tpu_custom_call.1} parent=1 // pred_check_branch
      %22 = sbr.rel (0) target = $region9
    $region8: #{tpu_custom_call.1} parent=1 // pred_region
      %s24 = ssub.s32 6144, 6144
      %25 = vsyncadd [#allocation6], %s24
      %s26 = sshll.u32 [#allocation5], 4
      %s27 = int_to_ptr.vmem [resolvable:$true] %s26
      %32 = dma.hbm_to_vmem [thread:$0]  %s1, 6144, %s27, [#allocation6], 128, 128, 8
    $region9: #{tpu_custom_call.1} parent=1 // pred_fallthru
      _
    // Predicated region
    $region10: #{tpu_custom_call.1} parent=1 // pred_check
      _
    $region11: #{tpu_custom_call.1} parent=1 // pred_check_branch
      %34 = sbr.rel (0) target = $region13
    $region12: #{tpu_custom_call.1} parent=1 // pred_region
      %s36 = ssub.s32 256, 256
      %37 = vsyncadd [#allocation6], %s36
      %s39 = sshll.u32 [#allocation7], 4
      %s40 = int_to_ptr.vmem [resolvable:$true] %s39
      %42 = dma.hbm_to_vmem [thread:$0]  %s2, 256, %s40, [#allocation6]
    $region13: #{tpu_custom_call.1} parent=1 // pred_fallthru
      _
    // Predicated region
    $region14: #{tpu_custom_call.1} parent=1 // pred_check
      _
    $region15: #{tpu_custom_call.1} parent=1 // pred_check_branch
      %44 = sbr.rel (0) target = $region17
    $region16: #{tpu_custom_call.1} parent=1 // pred_region
      %45 = dma.done [#allocation3], 128
    $region17: #{tpu_custom_call.1} parent=1 // pred_fallthru
      _
    // Predicated region
    $region18: #{tpu_custom_call.1} parent=1 // pred_check
      _
    $region19: #{tpu_custom_call.1} parent=1 // pred_check_branch
      %47 = sbr.rel (0) target = $region21
    $region20: #{tpu_custom_call.1} parent=1 // pred_region
      %48 = dma.done [#allocation6], 6144
    $region21: #{tpu_custom_call.1} parent=1 // pred_fallthru
      _
    // Predicated region
    $region22: #{tpu_custom_call.1} parent=1 // pred_check
      _
    $region23: #{tpu_custom_call.1} parent=1 // pred_check_branch
      %50 = sbr.rel (0) target = $region25
    $region24: #{tpu_custom_call.1} parent=1 // pred_region
      %51 = dma.done [#allocation6], 256
    $region25: #{tpu_custom_call.1} parent=1 // pred_fallthru
      _
    %v53 = vld [vmem:[#allocation2] sm:$0xff]
    %v54 = vld [vmem:[#allocation5] sm:$0xf]
    %v55 = vld [vmem:[#allocation5 + $0x8] sm:$0xf]
    %v56 = vld [vmem:[#allocation5 + $0x10] sm:$0xf]
    %v57 = vld [vmem:[#allocation5 + $0x18] sm:$0xf]
    %v58 = vld [vmem:[#allocation5 + $0x20] sm:$0xf]
    %v59 = vld [vmem:[#allocation5 + $0x28] sm:$0xf]
    %v60 = vld [vmem:[#allocation5 + $0x30] sm:$0xf]
    %v61 = vld [vmem:[#allocation5 + $0x38] sm:$0xf]
    %v62 = vld [vmem:[#allocation5 + $0x40] sm:$0xf]
    %v63 = vld [vmem:[#allocation5 + $0x48] sm:$0xf]
    %v64 = vld [vmem:[#allocation5 + $0x50] sm:$0xf]
    %v65 = vld [vmem:[#allocation5 + $0x58] sm:$0xf]
    %v66 = vld [vmem:[#allocation5 + $0x60] sm:$0xf]
    %v67 = vld [vmem:[#allocation5 + $0x68] sm:$0xf]
    %v68 = vld [vmem:[#allocation5 + $0x70] sm:$0xf]
    %v69 = vld [vmem:[#allocation5 + $0x78] sm:$0xf]
    %v70 = vld [vmem:[#allocation5 + $0x80] sm:$0xf]
    %v71 = vld [vmem:[#allocation5 + $0x88] sm:$0xf]
    %v72 = vld [vmem:[#allocation5 + $0x90] sm:$0xf]
    %v73 = vld [vmem:[#allocation5 + $0x98] sm:$0xf]
    %v74 = vld [vmem:[#allocation5 + $0xa0] sm:$0xf]
    %v75 = vld [vmem:[#allocation5 + $0xa8] sm:$0xf]
    %v76 = vld [vmem:[#allocation5 + $0xb0] sm:$0xf]
    %v77 = vld [vmem:[#allocation5 + $0xb8] sm:$0xf]
    %v78 = vld [vmem:[#allocation5 + $0xc0] sm:$0xf]
    %v79 = vld [vmem:[#allocation5 + $0xc8] sm:$0xf]
    %v80 = vld [vmem:[#allocation5 + $0xd0] sm:$0xf]
    %v81 = vld [vmem:[#allocation5 + $0xd8] sm:$0xf]
    %v82 = vld [vmem:[#allocation5 + $0xe0] sm:$0xf]
    %v83 = vld [vmem:[#allocation5 + $0xe8] sm:$0xf]
    %v84 = vld [vmem:[#allocation5 + $0xf0] sm:$0xf]
    %v85 = vld [vmem:[#allocation5 + $0xf8] sm:$0xf]
    %v86 = vld [vmem:[#allocation5 + $0x100] sm:$0xff]
    %v87 = vld [vmem:[#allocation5 + $0x108] sm:$0xff]
    %v88 = vld [vmem:[#allocation5 + $0x110] sm:$0xff]
    %v89 = vld [vmem:[#allocation5 + $0x118] sm:$0xff]
    %v90 = vld [vmem:[#allocation5 + $0x120] sm:$0xff]
    %v91 = vld [vmem:[#allocation5 + $0x128] sm:$0xff]
    %v92 = vld [vmem:[#allocation5 + $0x130] sm:$0xff]
    %v93 = vld [vmem:[#allocation5 + $0x138] sm:$0xff]
    %v94 = vld [vmem:[#allocation5 + $0x140] sm:$0xff]
    %v95 = vld [vmem:[#allocation5 + $0x148] sm:$0xff]
    %v96 = vld [vmem:[#allocation5 + $0x150] sm:$0xff]
    %v97 = vld [vmem:[#allocation5 + $0x158] sm:$0xff]
    %v98 = vld [vmem:[#allocation5 + $0x160] sm:$0xff]
    %v99 = vld [vmem:[#allocation5 + $0x168] sm:$0xff]
    %v100 = vld [vmem:[#allocation5 + $0x170] sm:$0xff]
    %v101 = vld [vmem:[#allocation5 + $0x178] sm:$0xff]
    %v102 = vld [vmem:[#allocation7] ss:$0 sm:$0xff]
    %v103 = vld [vmem:[#allocation7 + $0x1] ss:$0 sm:$0xff]
    %s104 = scalar_lea.vmem [#allocation7], 2
    %v105 = vld [vmem:[%s104] ss:$8 sm:$0x3]
    %v106 = vpack.c.bf16 %v53, %v53
    %v123 = vunpack.c.l.b16 %v54
    %v124 = vunpack.c.l.b16 %v55
    %v125 = vunpack.c.l.b16 %v56
    %v126 = vunpack.c.l.b16 %v57
    %v127 = vunpack.c.l.b16 %v58
    %v128 = vunpack.c.l.b16 %v59
    %v129 = vunpack.c.l.b16 %v60
    %v130 = vunpack.c.l.b16 %v61
    %v131 = vunpack.c.l.b16 %v62
    %v132 = vunpack.c.l.b16 %v63
    %v133 = vunpack.c.l.b16 %v64
    %v134 = vunpack.c.l.b16 %v65
    %v135 = vunpack.c.l.b16 %v66
    %v136 = vunpack.c.l.b16 %v67
    %v137 = vunpack.c.l.b16 %v68
    %v138 = vunpack.c.l.b16 %v69
    %v139 = vpack.c.b16 %v124, %v123
    %v140 = vpack.c.b16 %v126, %v125
    %v141 = vpack.c.b16 %v128, %v127
    %v142 = vpack.c.b16 %v130, %v129
    %v143 = vpack.c.b16 %v132, %v131
    %v144 = vpack.c.b16 %v134, %v133
    %v145 = vpack.c.b16 %v136, %v135
    %v146 = vpack.c.b16 %v138, %v137
    %155 = vmatprep.subr.bf16.mxu0 0
    %156 = vmatpush1.bf16.msra.mxu0 %v139
    %157 = vmatprep.subr.bf16.mxu0 0
    %158 = vmatpush1.bf16.msra.mxu0 %v140
    %159 = vmatprep.subr.bf16.mxu0 0
    %160 = vmatpush1.bf16.msra.mxu0 %v141
    %161 = vmatprep.subr.bf16.mxu0 0
    %162 = vmatpush1.bf16.msra.mxu0 %v142
    %163 = vmatprep.subr.bf16.mxu0 0
    %164 = vmatpush1.bf16.msra.mxu0 %v143
    %165 = vmatprep.subr.bf16.mxu0 0
    %166 = vmatpush1.bf16.msra.mxu0 %v144
    %167 = vmatprep.subr.bf16.mxu0 0
    %168 = vmatpush1.bf16.msra.mxu0 %v145
    %169 = vmatprep.subr.bf16.mxu0 0
    %170 = vmatpush1.bf16.msra.mxu0 %v146
    %171 = vmatprep.subr.bf16.mxu0 0
    %172 = vmatpush1.bf16.msra.mxu0 0
    %173 = vmatprep.subr.bf16.mxu0 0
    %174 = vmatpush1.bf16.msra.mxu0 0
    %175 = vmatprep.subr.bf16.mxu0 0
    %176 = vmatpush1.bf16.msra.mxu0 0
    %177 = vmatprep.subr.bf16.mxu0 0
    %178 = vmatpush1.bf16.msra.mxu0 0
    %179 = vmatprep.subr.bf16.mxu0 0
    %180 = vmatpush1.bf16.msra.mxu0 0
    %181 = vmatprep.subr.bf16.mxu0 0
    %182 = vmatpush1.bf16.msra.mxu0 0
    %183 = vmatprep.subr.bf16.mxu0 0
    %184 = vmatpush1.bf16.msra.mxu0 0
    %185 = vmatprep.subr.bf16.mxu0 0
    %186 = vmatpush1.bf16.msra.mxu0 0
    %187 = vmatprep.mubr.bf16.mxu0 0
    %188 = vmatmul.mubr.bf16.gmra.mrb[0].mxu0 %v106
    %v189 = vpop.f32.mrb[0].mxu0
    %v190 = vadd.f32 %v102, %v189
    %v191 = vpop.f32.mrb[0].mxu0
    %v192 = vpop.f32.mrb[0].mxu0
    %v193 = vpop.f32.mrb[0].mxu0
    %194 = vdwg.mxu0
    %v195 = vmax.f32 %v190, 0.0
    %v196 = vpack.c.bf16 %v195, %v195
    %v213 = vunpack.c.l.b16 %v70
    %v214 = vunpack.c.l.b16 %v71
    %v215 = vunpack.c.l.b16 %v72
    %v216 = vunpack.c.l.b16 %v73
    %v217 = vunpack.c.l.b16 %v74
    %v218 = vunpack.c.l.b16 %v75
    %v219 = vunpack.c.l.b16 %v76
    %v220 = vunpack.c.l.b16 %v77
    %v221 = vunpack.c.l.b16 %v78
    %v222 = vunpack.c.l.b16 %v79
    %v223 = vunpack.c.l.b16 %v80
    %v224 = vunpack.c.l.b16 %v81
    %v225 = vunpack.c.l.b16 %v82
    %v226 = vunpack.c.l.b16 %v83
    %v227 = vunpack.c.l.b16 %v84
    %v228 = vunpack.c.l.b16 %v85
    %v229 = vpack.c.b16 %v214, %v213
    %v230 = vpack.c.b16 %v216, %v215
    %v231 = vpack.c.b16 %v218, %v217
    %v232 = vpack.c.b16 %v220, %v219
    %v233 = vpack.c.b16 %v222, %v221
    %v234 = vpack.c.b16 %v224, %v223
    %v235 = vpack.c.b16 %v226, %v225
    %v236 = vpack.c.b16 %v228, %v227
    %245 = vmatprep.subr.bf16.mxu0 0
    %246 = vmatpush1.bf16.msra.mxu0 %v229
    %247 = vmatprep.subr.bf16.mxu0 0
    %248 = vmatpush1.bf16.msra.mxu0 %v230
    %249 = vmatprep.subr.bf16.mxu0 0
    %250 = vmatpush1.bf16.msra.mxu0 %v231
    %251 = vmatprep.subr.bf16.mxu0 0
    %252 = vmatpush1.bf16.msra.mxu0 %v232
    %253 = vmatprep.subr.bf16.mxu0 0
    %254 = vmatpush1.bf16.msra.mxu0 %v233
    %255 = vmatprep.subr.bf16.mxu0 0
    %256 = vmatpush1.bf16.msra.mxu0 %v234
    %257 = vmatprep.subr.bf16.mxu0 0
    %258 = vmatpush1.bf16.msra.mxu0 %v235
    %259 = vmatprep.subr.bf16.mxu0 0
    %260 = vmatpush1.bf16.msra.mxu0 %v236
    %261 = vmatprep.subr.bf16.mxu0 0
    %262 = vmatpush1.bf16.msra.mxu0 0
    %263 = vmatprep.subr.bf16.mxu0 0
    %264 = vmatpush1.bf16.msra.mxu0 0
    %265 = vmatprep.subr.bf16.mxu0 0
    %266 = vmatpush1.bf16.msra.mxu0 0
    %267 = vmatprep.subr.bf16.mxu0 0
    %268 = vmatpush1.bf16.msra.mxu0 0
    %269 = vmatprep.subr.bf16.mxu0 0
    %270 = vmatpush1.bf16.msra.mxu0 0
    %271 = vmatprep.subr.bf16.mxu0 0
    %272 = vmatpush1.bf16.msra.mxu0 0
    %273 = vmatprep.subr.bf16.mxu0 0
    %274 = vmatpush1.bf16.msra.mxu0 0
    %275 = vmatprep.subr.bf16.mxu0 0
    %276 = vmatpush1.bf16.msra.mxu0 0
    %277 = vmatprep.mubr.bf16.mxu0 0
    %278 = vmatmul.mubr.bf16.gmra.mrb[0].mxu0 %v196
    %v279 = vpop.f32.mrb[0].mxu0
    %v280 = vadd.f32 %v103, %v279
    %v281 = vpop.f32.mrb[0].mxu0
    %v282 = vpop.f32.mrb[0].mxu0
    %v283 = vpop.f32.mrb[0].mxu0
    %284 = vdwg.mxu0
    %v285 = vmax.f32 %v280, 0.0
    %v286 = vpack.c.bf16 %v285, %v285
    %v288 = vlaneseq
    %v289 = vshrl.u32 %v288, 7
    %v290 = vsub.s32 0, %v289
    %v291 = vrot.slane %v105, %v290
    %v292 = vlaneseq
    %v293 = vshrl.u32 %v292, 7
    %v294 = vsub.s32 1, %v293
    %v295 = vrot.slane %v105, %v294
    %v314 = vunpack.c.l.b16 %v86
    %v315 = vunpack.c.h.b16 %v86
    %v316 = vunpack.c.l.b16 %v87
    %v317 = vunpack.c.h.b16 %v87
    %v318 = vunpack.c.l.b16 %v88
    %v319 = vunpack.c.h.b16 %v88
    %v320 = vunpack.c.l.b16 %v89
    %v321 = vunpack.c.h.b16 %v89
    %v322 = vunpack.c.l.b16 %v90
    %v323 = vunpack.c.h.b16 %v90
    %v324 = vunpack.c.l.b16 %v91
    %v325 = vunpack.c.h.b16 %v91
    %v326 = vunpack.c.l.b16 %v92
    %v327 = vunpack.c.h.b16 %v92
    %v328 = vunpack.c.l.b16 %v93
    %v329 = vunpack.c.h.b16 %v93
    %v330 = vunpack.c.l.b16 %v94
    %v331 = vunpack.c.h.b16 %v94
    %v332 = vunpack.c.l.b16 %v95
    %v333 = vunpack.c.h.b16 %v95
    %v334 = vunpack.c.l.b16 %v96
    %v335 = vunpack.c.h.b16 %v96
    %v336 = vunpack.c.l.b16 %v97
    %v337 = vunpack.c.h.b16 %v97
    %v338 = vunpack.c.l.b16 %v98
    %v339 = vunpack.c.h.b16 %v98
    %v340 = vunpack.c.l.b16 %v99
    %v341 = vunpack.c.h.b16 %v99
    %v342 = vunpack.c.l.b16 %v100
    %v343 = vunpack.c.h.b16 %v100
    %v344 = vunpack.c.l.b16 %v101
    %v345 = vunpack.c.h.b16 %v101
    %v346 = vpack.c.b16 %v316, %v314
    %v347 = vpack.c.b16 %v317, %v315
    %v348 = vpack.c.b16 %v320, %v318
    %v349 = vpack.c.b16 %v321, %v319
    %v350 = vpack.c.b16 %v324, %v322
    %v351 = vpack.c.b16 %v325, %v323
    %v352 = vpack.c.b16 %v328, %v326
    %v353 = vpack.c.b16 %v329, %v327
    %v354 = vpack.c.b16 %v332, %v330
    %v355 = vpack.c.b16 %v333, %v331
    %v356 = vpack.c.b16 %v336, %v334
    %v357 = vpack.c.b16 %v337, %v335
    %v358 = vpack.c.b16 %v340, %v338
    %v359 = vpack.c.b16 %v341, %v339
    %v360 = vpack.c.b16 %v344, %v342
    %v361 = vpack.c.b16 %v345, %v343
    %378 = vmatprep.subr.bf16.mxu0 %v347
    %379 = vmatpush1.bf16.msra.mxu0 %v346
    %380 = vmatprep.subr.bf16.mxu0 %v349
    %381 = vmatpush1.bf16.msra.mxu0 %v348
    %382 = vmatprep.subr.bf16.mxu0 %v351
    %383 = vmatpush1.bf16.msra.mxu0 %v350
    %384 = vmatprep.subr.bf16.mxu0 %v353
    %385 = vmatpush1.bf16.msra.mxu0 %v352
    %386 = vmatprep.subr.bf16.mxu0 %v355
    %387 = vmatpush1.bf16.msra.mxu0 %v354
    %388 = vmatprep.subr.bf16.mxu0 %v357
    %389 = vmatpush1.bf16.msra.mxu0 %v356
    %390 = vmatprep.subr.bf16.mxu0 %v359
    %391 = vmatpush1.bf16.msra.mxu0 %v358
    %392 = vmatprep.subr.bf16.mxu0 %v361
    %393 = vmatpush1.bf16.msra.mxu0 %v360
    %394 = vmatprep.subr.bf16.mxu0 0
    %395 = vmatpush1.bf16.msra.mxu0 0
    %396 = vmatprep.subr.bf16.mxu0 0
    %397 = vmatpush1.bf16.msra.mxu0 0
    %398 = vmatprep.subr.bf16.mxu0 0
    %399 = vmatpush1.bf16.msra.mxu0 0
    %400 = vmatprep.subr.bf16.mxu0 0
    %401 = vmatpush1.bf16.msra.mxu0 0
    %402 = vmatprep.subr.bf16.mxu0 0
    %403 = vmatpush1.bf16.msra.mxu0 0
    %404 = vmatprep.subr.bf16.mxu0 0
    %405 = vmatpush1.bf16.msra.mxu0 0
    %406 = vmatprep.subr.bf16.mxu0 0
    %407 = vmatpush1.bf16.msra.mxu0 0
    %408 = vmatprep.subr.bf16.mxu0 0
    %409 = vmatpush1.bf16.msra.mxu0 0
    %410 = vmatprep.mubr.bf16.mxu0 0
    %411 = vmatmul.mubr.bf16.gmra.mrb[0].mxu0 %v286
    %v412 = vpop.f32.mrb[0].mxu0
    %v413 = vadd.f32 %v291, %v412
    %v414 = vpop.f32.mrb[0].mxu0
    %v415 = vadd.f32 %v295, %v414
    %v416 = vpop.f32.mrb[0].mxu0
    %v417 = vpop.f32.mrb[0].mxu0
    %418 = vdwg.mxu0
    %v419 = vlaneseq
    %v420 = vand.u32 %v419, 127
    %v421 = vadd.s32 %v420, 128
    %v422 = vmax.f32 %v413, -20.0
    %v423 = vmax.f32 %v415, -20.0
    %v424 = vmin.f32 %v422, 2.0
    %v425 = vmin.f32 %v423, 2.0
    %vm426 = vcmp.ge.s32.totalorder %v420, 128
    %vm427 = vcmp.ge.s32.totalorder %v421, 128
    %v428 = vsel %vm426, %v424, %v413
    %v429 = vsel %vm427, %v425, %v415
    %430 = vst [vmem:[#allocation8] sm:$0xff] %v428
    %431 = vst [vmem:[#allocation8 + $0x8] sm:$0xff] %v429
    // Predicated region
    $region26: #{tpu_custom_call.1} parent=1 // pred_check
      _
    $region27: #{tpu_custom_call.1} parent=1 // pred_check_branch
      %433 = sbr.rel (0) target = $region29
    $region28: #{tpu_custom_call.1} parent=1 // pred_region
      %s435 = ssub.s32 256, 256
      %436 = vsyncadd [#allocation4], %s435
      %s438 = sshll.u32 [#allocation8], 4
      %s439 = int_to_ptr.vmem [resolvable:$true] %s438
      %441 = dma.vmem_to_hbm [thread:$0]  %s439, 256, %s3, [#allocation4]
    $region29: #{tpu_custom_call.1} parent=1 // pred_fallthru
      _
    // Predicated region
    $region30: #{tpu_custom_call.1} parent=1 // pred_check
      _
    $region31: #{tpu_custom_call.1} parent=1 // pred_check_branch
      %443 = sbr.rel (0) target = $region33
    $region32: #{tpu_custom_call.1} parent=1 // pred_region
      %444 = dma.done [#allocation4], 256
    $region33: #{tpu_custom_call.1} parent=1 // pred_fallthru
      _
    %445 = vsyncpa [#allocation3], 1
    %446 = vsyncpa [#allocation6], 1
    %447 = vsyncpa [#allocation4], 1

</llo_original>
